<compile_context>
chip_gen: v7x
topology: tpu7x:2x2x1
jax: 0.10.0
libtpu: 0.0.40
codegen_flags: <defaults>
</compile_context>

<pallas_src>
import jax
import jax.numpy as jnp
from jax import lax
from jax.experimental import pallas as pl
from jax.experimental.pallas import tpu as pltpu

_EPS = 1e-5  # PyTorch BatchNorm default eps


# ----------------------------- Pallas kernel ---------------------------------
def _fusion_kernel(pf_ref, img_ref, wp_ref, wi_ref, b_ref, out_ref):
    """pf (1,Nblk,C_P) native layout, img (1,C_I,Nblk), w_p/w_i (C_out+1,C_*), bias (C_out+1,1)."""
    C_out = out_ref.shape[1]

    x_p = pf_ref[0]                       # (Nblk, C_P)  point features, native (points, channels)
    x_i = img_ref[0]                      # (C_I, Nblk)  image features, channels first
    w_p = wp_ref[...]                     # (C_out+1, C_P): rows [0:C_out]=conv4 point cols, row C_out=attn
    w_i = wi_ref[...]                     # (C_out+1, C_I): rows [0:C_out]=conv4 img cols,   row C_out=attn
    bias = b_ref[...]                     # (C_out+1, 1)

    # One MXU pass per input tensor; produces conv4 partials AND attention logits at once.
    # Contract the channel axis of the native (Nblk, C_P) tile -> (C_out+1, Nblk); no host transpose.
    y_p = lax.dot_general(w_p, x_p, dimension_numbers=(((1,), (1,)), ((), ())),
                          preferred_element_type=jnp.float32)          # (C_out+1, Nblk)
    y_i = jnp.dot(w_i, x_i, preferred_element_type=jnp.float32)        # (C_out+1, Nblk)

    # attention logits live in the last row -> lane-dense (1, Nblk)
    att_pre = y_p[C_out:] + y_i[C_out:] + bias[C_out:]      # bn3(conv3(cat(bn1conv1, bn2conv2)))
    att = jax.nn.sigmoid(jnp.maximum(att_pre, 0.0))         # sigmoid(relu(.))

    # att is a per-point scalar, so conv4's image branch factors:
    #   w4i @ (x_i * att) == (w4i @ x_i) * att
    o = y_p[:C_out] + y_i[:C_out] * att + bias[:C_out]      # bn4(conv4(cat(pf, img_new)))
    out_ref[0] = jnp.maximum(o, 0.0).astype(out_ref.dtype)  # relu


# ------------------------------- wrapper --------------------------------------
def _round_up(x, m):
    return ((x + m - 1) // m) * m


def _round_down_128(x):
    return (x // 128) * 128


def _select_nblk(n128, batch, c_p, c_i, c_out, in_bytes, out_bytes, *,
                 cap=8192, min_total_steps=8, vmem_budget=24 << 20):
    """Pick a lane-aligned points-per-step block respecting VMEM and grid-depth constraints."""
    r8 = lambda c: _round_up(c, 8)
    # double-buffered per-point VMEM bytes; the (Nblk, C_P) tile lane-pads C_P -> 128
    per_point = 2 * (128 * in_bytes + r8(c_i) * in_bytes + r8(c_out) * out_bytes)
    nblk_vmem = max(128, _round_down_128(vmem_budget // per_point))
    # keep >= min_total_steps grid steps so both v7x TCs get a deep software pipeline
    steps_per_batch = max(1, -(-min_total_steps // batch))
    nblk_steps = max(128, _round_down_128(n128 // steps_per_batch))
    nblk = max(128, min(cap, nblk_vmem, nblk_steps, n128))
    vmem_est = per_point * nblk + 3 * r8(c_out + 1) * 128 * 4   # + resident weight slabs
    return nblk, vmem_est


def fusion_conv_forward(point_features, img_features, w_p, w_i, bias, *, nblk_cap=8192):
    """point_features: (B, N, C_P), img_features: (B, C_I, H, W) -> (B, C_out, N)."""
    B, N, C_P = point_features.shape
    _, C_I, H, W = img_features.shape
    assert N == H * W, "point count must equal H*W (module reshapes point feats to (B,-1,H,W))"
    C_out = w_p.shape[0] - 1
    assert w_p.shape == (C_out + 1, C_P) and w_i.shape == (C_out + 1, C_I)
    assert bias.shape == (C_out + 1, 1)

    act_dtype = point_features.dtype
    out_dtype = act_dtype
    if act_dtype != jnp.float32:          # e.g. bf16 producers: keep MXU operands same dtype
        w_p, w_i, bias = (w.astype(act_dtype) for w in (w_p, w_i, bias))

    in_bytes = jnp.dtype(act_dtype).itemsize
    out_bytes = jnp.dtype(out_dtype).itemsize

    # image tensor: free reshape only (no transpose); point tensor stays in native layout
    img_flat = img_features.reshape(B, C_I, N)

    n128 = _round_up(N, 128)
    Nblk, vmem_est = _select_nblk(n128, B, C_P, C_I, C_out, in_bytes, out_bytes, cap=nblk_cap)
    N_pad = _round_up(N, Nblk)
    if N_pad != N:                        # pad so every block is full & lane-aligned (sliced off below)
        point_features = jnp.pad(point_features, ((0, 0), (0, N_pad - N), (0, 0)))
        img_flat = jnp.pad(img_flat, ((0, 0), (0, 0), (0, N_pad - N)))

    grid = (B, N_pad // Nblk)

    cost = pl.CostEstimate(
        flops=int(2 * B * N_pad * (C_P + C_I) * (C_out + 1) + 6 * B * N_pad * C_out),
        transcendentals=int(B * N_pad),
        bytes_accessed=int(B * N_pad * ((C_P + C_I) * in_bytes + C_out * out_bytes)
                           + (C_out + 1) * (C_P + C_I + 1) * 4),
    )

    out = pl.pallas_call(
        _fusion_kernel,
        out_shape=jax.ShapeDtypeStruct((B, C_out, N_pad), out_dtype),
        grid_spec=pltpu.PrefetchScalarGridSpec(
            num_scalar_prefetch=0,
            grid=grid,
            in_specs=[
                pl.BlockSpec((1, Nblk, C_P), lambda b, n: (b, n, 0)),   # native point layout
                pl.BlockSpec((1, C_I, Nblk), lambda b, n: (b, 0, n)),   # channels-first image
                # grid-resident weight slabs (constant index -> single DMA each)
                pl.BlockSpec((C_out + 1, C_P), lambda b, n: (0, 0)),
                pl.BlockSpec((C_out + 1, C_I), lambda b, n: (0, 0)),
                pl.BlockSpec((C_out + 1, 1), lambda b, n: (0, 0)),
            ],
            out_specs=pl.BlockSpec((1, C_out, Nblk), lambda b, n: (b, 0, n)),
        ),
        compiler_params=pltpu.CompilerParams(
            dimension_semantics=("parallel", "parallel"),               # both axes independent
            vmem_limit_bytes=int(min(48 << 20, max(32 << 20, 2 * vmem_est)))),
        cost_estimate=cost,
    )(point_features, img_flat, w_p, w_i, bias)

    if N_pad != N:
        out = out[:, :, :N]
    return out   # (B, C_out, N) = PyTorch Conv1d output layout


# ------------------------- parameter construction -----------------------------
def init_module_params(key, C_I, C_P, C_out):
    """Deterministic stand-ins for the nn.Module parameters (shapes from __init__)."""
    ks = jax.random.split(key, 24)

    def nrm(k, shape, s=0.2):
        return s * jax.random.normal(k, shape, jnp.float32)

    def pos(k, shape):
        return jax.random.uniform(k, shape, jnp.float32, 0.5, 1.5)

    p = {
        "conv1_w": nrm(ks[0], (C_P // 4, C_P)),        # Conv1d(C_P, C_P//4, 1) weight (squeezed)
        "conv1_b": nrm(ks[1], (C_P // 4,)),
        "conv2_w": nrm(ks[2], (C_I // 4, C_I)),        # Conv2d 1x1, bias=False
        "conv3_w": nrm(ks[3], (1, C_I // 2)),          # Conv2d 1x1, bias=False
        "conv4_w": nrm(ks[4], (C_P, C_I + C_P)),       # Conv1d(C_I+C_P, C_P, 1)
        "conv4_b": nrm(ks[5], (C_P,)),
    }
    bn_channels = [("bn1", C_I // 4), ("bn2", C_P // 4), ("bn3", 1), ("bn4", C_out)]
    for i, (name, c) in enumerate(bn_channels):
        base = 6 + 4 * i
        p[f"{name}_gamma"] = pos(ks[base], (c,))
        p[f"{name}_beta"] = nrm(ks[base + 1], (c,))
        p[f"{name}_rm"] = nrm(ks[base + 2], (c,))
        p[f"{name}_rv"] = pos(ks[base + 3], (c,))
    return p


def fold_params(p, C_I, C_P):
    """Fold eval-mode BN into the 1x1 convs, pre-compose conv1/conv2 with conv3, and split into
    w_p (C_out+1, C_P), w_i (C_out+1, C_I), bias (C_out+1, 1) for the W @ X kernel orientation."""
    assert C_P % 4 == 0 and C_I % 4 == 0
    assert C_P // 4 + C_I // 4 == C_I // 2, \
        "conv3 split requires C_P//4 + C_I//4 == C_I//2 (module only consistent for C_P == C_I)"

    def bn_fold(name):
        scale = p[f"{name}_gamma"] / jnp.sqrt(p[f"{name}_rv"] + _EPS)
        shift = p[f"{name}_beta"] - p[f"{name}_rm"] * scale
        return scale, shift

    s1, t1 = bn_fold("bn1")
    s2, t2 = bn_fold("bn2")
    s3, t3 = bn_fold("bn3")
    s4, t4 = bn_fold("bn4")

    # BN folded into the convs, (out, in) orientation for W @ X.
    w1 = p["conv1_w"] * s1[:, None]                 # (C_P//4, C_P)
    b1 = p["conv1_b"] * s1 + t1                     # (C_P//4,)
    w2 = p["conv2_w"] * s2[:, None]                 # (C_I//4, C_I)
    b2 = t2                                         # (C_I//4,)
    w3 = p["conv3_w"] * s3[:, None]                 # (1, C_I//2)
    b3 = t3                                         # (1,)
    w3p, w3i = w3[:, :C_P // 4], w3[:, C_P // 4:]   # conv3 cat order: [point_proj, img_f]
    w4 = p["conv4_w"] * s4[:, None]                 # (C_out, C_P + C_I), cat order [pf, img_new]
    b4 = p["conv4_b"] * s4 + t4                     # (C_out,)

    # Pre-compose the purely linear conv1/conv2 -> conv3 chain (no nonlinearity in between).
    w13 = w3p @ w1                                  # (1, C_P)
    w23 = w3i @ w2                                  # (1, C_I)
    b13 = w3p @ b1 + w3i @ b2 + b3                  # (1,)

    w_p = jnp.concatenate([w4[:, :C_P], w13], axis=0)          # (C_out+1, C_P)
    w_i = jnp.concatenate([w4[:, C_P:], w23], axis=0)          # (C_out+1, C_I)
    bias = jnp.concatenate([b4, b13])[:, None]                 # (C_out+1, 1)
    return w_p, w_i, bias


# --------------------------- pure-JAX reference --------------------------------
def reference_forward(point_features, img_features, p, C_I):
    """Literal port of Fusion_Conv.forward (eval-mode BN) for verification (f32 HIGHEST)."""
    B, N, _ = point_features.shape
    H, W = img_features.shape[2], img_features.shape[3]
    hp = jax.lax.Precision.HIGHEST

    def bn(x, name):
        g, bt = p[f"{name}_gamma"], p[f"{name}_beta"]
        rm, rv = p[f"{name}_rm"], p[f"{name}_rv"]
        shape = [1, -1] + [1] * (x.ndim - 2)
        return (x - rm.reshape(shape)) / jnp.sqrt(rv.reshape(shape) + _EPS) * g.reshape(shape) \
            + bt.reshape(shape)

    pf = jnp.transpose(point_features, (0, 2, 1))                                   # (B, C_P, N)
    point_f = bn(jnp.einsum("oc,bcn->bon", p["conv1_w"], pf, precision=hp)
                 + p["conv1_b"][None, :, None], "bn1")
    img_f = bn(jnp.einsum("oc,bchw->bohw", p["conv2_w"], img_features, precision=hp), "bn2")
    point_proj = point_f.reshape(B, -1, H, W)
    fusion = jnp.concatenate([point_proj, img_f], axis=1)
    fusion = jax.nn.relu(bn(jnp.einsum("oc,bchw->bohw", p["conv3_w"], fusion, precision=hp), "bn3"))
    att = jax.nn.sigmoid(fusion)
    img_new = (img_features * att).reshape(B, C_I, -1)
    fusion_new = jnp.concatenate([pf, img_new], axis=1)
    out = jax.nn.relu(bn(jnp.einsum("oc,bcn->bon", p["conv4_w"], fusion_new, precision=hp)
                         + p["conv4_b"][None, :, None], "bn4"))
    return out                                                                       # (B, C_P, N)


# ---------------------------------- main ---------------------------------------
if __name__ == "__main__":
    B, C, H, W = 2, 16, 16, 32
    N = H * W                                   # 512 points -> lane-dense blocks
    inplanes_I = inplanes_P = outplanes = C     # required for the module's forward to be consistent

    key = jax.random.PRNGKey(0)
    k_pt, k_img, k_w = jax.random.split(key, 3)
    point_features = jax.random.normal(k_pt, (B, N, inplanes_P), jnp.float32)
    img_features = jax.random.normal(k_img, (B, inplanes_I, H, W), jnp.float32)

    raw_params = init_module_params(k_w, inplanes_I, inplanes_P, outplanes)
    w_p, w_i, bias = fold_params(raw_params, inplanes_I, inplanes_P)

    out = fusion_conv_forward(point_features, img_features, w_p, w_i, bias)
    out = jax.block_until_ready(out)

    ref = reference_forward(point_features, img_features, raw_params, inplanes_I)
    assert out.shape == (B, outplanes, N), out.shape
    # Default-precision MXU (bf16 passes) + pre-composed / re-associated folded weights
    # -> looser tolerance than the f32 HIGHEST reference.
    max_err = float(jnp.max(jnp.abs(out - ref)))
    assert bool(jnp.allclose(out, ref, atol=5e-2, rtol=5e-2)), f"mismatch vs reference, max err {max_err}"

    print("KERNEL_OK")
</pallas_src>

<mosaic_0001>
module attributes {stable_mosaic.version = 11 : i64} {
  func.func @_fusion_kernel(%arg0: i32, %arg1: i32, %arg2: memref<1x128x16xf32, #tpu.memory_space<vmem>>, %arg3: memref<1x16x128xf32, #tpu.memory_space<vmem>>, %arg4: memref<17x16xf32, #tpu.memory_space<vmem>>, %arg5: memref<17x16xf32, #tpu.memory_space<vmem>>, %arg6: memref<17x1xf32, #tpu.memory_space<vmem>>, %arg7: memref<1x16x128xf32, #tpu.memory_space<vmem>>) attributes {dimension_semantics = [#tpu.dimension_semantics<parallel>, #tpu.dimension_semantics<parallel>], iteration_bounds = array<i64: 2, 4>, scalar_prefetch = 0 : i64, scratch_operands = 0 : i64, tpu.core_type = #tpu.core_type<tc>, window_params = [{transform_indices = @transform_0, window_bounds = array<i64: 1, 128, 16>}, {transform_indices = @transform_1, window_bounds = array<i64: 1, 16, 128>}, {pipeline_mode = #tpu.pipeline_mode<synchronous>, transform_indices = @transform_2, window_bounds = array<i64: 17, 16>}, {pipeline_mode = #tpu.pipeline_mode<synchronous>, transform_indices = @transform_3, window_bounds = array<i64: 17, 16>}, {pipeline_mode = #tpu.pipeline_mode<synchronous>, transform_indices = @transform_4, window_bounds = array<i64: 17, 1>}, {transform_indices = @transform_5, window_bounds = array<i64: 1, 16, 128>}]} {
    %c0 = arith.constant 0 : index
    %c0_0 = arith.constant 0 : index
    %c0_1 = arith.constant 0 : index
    %0 = vector.load %arg2[%c0, %c0_0, %c0_1] : memref<1x128x16xf32, #tpu.memory_space<vmem>>, vector<1x128x16xf32>
    %1 = vector.shape_cast %0 : vector<1x128x16xf32> to vector<128x16xf32>
    %c0_2 = arith.constant 0 : index
    %c0_3 = arith.constant 0 : index
    %c0_4 = arith.constant 0 : index
    %2 = vector.load %arg3[%c0_2, %c0_3, %c0_4] : memref<1x16x128xf32, #tpu.memory_space<vmem>>, vector<1x16x128xf32>
    %3 = vector.shape_cast %2 : vector<1x16x128xf32> to vector<16x128xf32>
    %c0_5 = arith.constant 0 : index
    %c0_6 = arith.constant 0 : index
    %4 = vector.load %arg4[%c0_5, %c0_6] : memref<17x16xf32, #tpu.memory_space<vmem>>, vector<17x16xf32>
    %c0_7 = arith.constant 0 : index
    %c0_8 = arith.constant 0 : index
    %5 = vector.load %arg5[%c0_7, %c0_8] : memref<17x16xf32, #tpu.memory_space<vmem>>, vector<17x16xf32>
    %c0_9 = arith.constant 0 : index
    %c0_10 = arith.constant 0 : index
    %6 = vector.load %arg6[%c0_9, %c0_10] : memref<17x1xf32, #tpu.memory_space<vmem>>, vector<17x1xf32>
    %cst = arith.constant dense<0.000000e+00> : vector<17x128xf32>
    %7 = tpu.matmul %4, %1, %cst {dimension_numbers = #tpu.dot_dimension_numbers<[1], [1], [0], [0], [0, 0, 1, 0], [], []>} : vector<17x16xf32>, vector<128x16xf32>, vector<17x128xf32> -> vector<17x128xf32>
    %cst_11 = arith.constant dense<0.000000e+00> : vector<17x128xf32>
    %8 = tpu.matmul %5, %3, %cst_11 {dimension_numbers = #tpu.dot_dimension_numbers<[1], [0], [0], [1], [0, 0, 1, 1], [], []>} : vector<17x16xf32>, vector<16x128xf32>, vector<17x128xf32> -> vector<17x128xf32>
    %9 = vector.extract_strided_slice %7 {offsets = [16, 0], sizes = [1, 128], strides = [1, 1]} : vector<17x128xf32> to vector<1x128xf32>
    %10 = vector.extract_strided_slice %8 {offsets = [16, 0], sizes = [1, 128], strides = [1, 1]} : vector<17x128xf32> to vector<1x128xf32>
    %11 = arith.addf %9, %10 : vector<1x128xf32>
    %12 = vector.extract_strided_slice %6 {offsets = [16, 0], sizes = [1, 1], strides = [1, 1]} : vector<17x1xf32> to vector<1x1xf32>
    %13 = vector.broadcast %12 : vector<1x1xf32> to vector<1x128xf32>
    %14 = arith.addf %11, %13 : vector<1x128xf32>
    %cst_12 = arith.constant 0.000000e+00 : f32
    %15 = vector.broadcast %cst_12 : f32 to vector<1x128xf32>
    %16 = arith.maximumf %14, %15 : vector<1x128xf32>
    %17 = arith.negf %16 : vector<1x128xf32>
    %18 = math.exp %17 : vector<1x128xf32>
    %cst_13 = arith.constant 1.000000e+00 : f32
    %19 = vector.broadcast %cst_13 : f32 to vector<1x128xf32>
    %20 = arith.addf %19, %18 : vector<1x128xf32>
    %21 = arith.divf %19, %20 : vector<1x128xf32>
    %22 = vector.extract_strided_slice %7 {offsets = [0, 0], sizes = [16, 128], strides = [1, 1]} : vector<17x128xf32> to vector<16x128xf32>
    %23 = vector.extract_strided_slice %8 {offsets = [0, 0], sizes = [16, 128], strides = [1, 1]} : vector<17x128xf32> to vector<16x128xf32>
    %24 = vector.broadcast %21 : vector<1x128xf32> to vector<16x128xf32>
    %25 = arith.mulf %23, %24 : vector<16x128xf32>
    %26 = arith.addf %22, %25 : vector<16x128xf32>
    %27 = vector.extract_strided_slice %6 {offsets = [0, 0], sizes = [16, 1], strides = [1, 1]} : vector<17x1xf32> to vector<16x1xf32>
    %28 = vector.broadcast %27 : vector<16x1xf32> to vector<16x128xf32>
    %29 = arith.addf %26, %28 : vector<16x128xf32>
    %cst_14 = arith.constant 0.000000e+00 : f32
    %30 = vector.broadcast %cst_14 : f32 to vector<16x128xf32>
    %31 = arith.maximumf %29, %30 : vector<16x128xf32>
    %c0_15 = arith.constant 0 : index
    %c0_16 = arith.constant 0 : index
    %c0_17 = arith.constant 0 : index
    %32 = vector.load %arg7[%c0_15, %c0_16, %c0_17] : memref<1x16x128xf32, #tpu.memory_space<vmem>>, vector<1x16x128xf32>
    %33 = vector.shape_cast %32 : vector<1x16x128xf32> to vector<16x128xf32>
    %34 = vector.shape_cast %31 : vector<16x128xf32> to vector<1x16x128xf32>
    tpu.vector_store %arg7[%c0_15, %c0_16, %c0_17], %34 {strides = array<i32>} : memref<1x16x128xf32, #tpu.memory_space<vmem>>, vector<1x16x128xf32>,
    return
  }
  func.func @transform_0(%arg0: i32, %arg1: i32) -> (i32, i32, i32) {
    %c0_i32 = arith.constant 0 : i32
    %c0_i32_0 = arith.constant 0 : i32
    return %arg0, %arg1, %c0_i32 : i32, i32, i32
  }
  func.func @transform_1(%arg0: i32, %arg1: i32) -> (i32, i32, i32) {
    %c0_i32 = arith.constant 0 : i32
    %c0_i32_0 = arith.constant 0 : i32
    return %arg0, %c0_i32, %arg1 : i32, i32, i32
  }
  func.func @transform_2(%arg0: i32, %arg1: i32) -> (i32, i32) {
    %c0_i32 = arith.constant 0 : i32
    %c0_i32_0 = arith.constant 0 : i32
    %c0_i32_1 = arith.constant 0 : i32
    return %c0_i32, %c0_i32_0 : i32, i32
  }
  func.func @transform_3(%arg0: i32, %arg1: i32) -> (i32, i32) {
    %c0_i32 = arith.constant 0 : i32
    %c0_i32_0 = arith.constant 0 : i32
    %c0_i32_1 = arith.constant 0 : i32
    return %c0_i32, %c0_i32_0 : i32, i32
  }
  func.func @transform_4(%arg0: i32, %arg1: i32) -> (i32, i32) {
    %c0_i32 = arith.constant 0 : i32
    %c0_i32_0 = arith.constant 0 : i32
    %c0_i32_1 = arith.constant 0 : i32
    return %c0_i32, %c0_i32_0 : i32, i32
  }
  func.func @transform_5(%arg0: i32, %arg1: i32) -> (i32, i32, i32) {
    %c0_i32 = arith.constant 0 : i32
    %c0_i32_0 = arith.constant 0 : i32
    return %arg0, %c0_i32, %arg1 : i32, i32, i32
  }
}

</mosaic_0001>

<llo_original>
// kernel: tpu_custom_call.1
$region0: #{tpu_custom_call.1}
  #allocation0 [shape = 'u32[]', space=smem, size = 0x4, offset = 0x4, fixed_abs, tag = 'smem constant byte address 0x4 - core index']
  #allocation1 [shape = 'u32[144,128]{1,0:T(1,128)}', space=vmem, size = 0x12000, scoped, tag = 'internal scratch']
  %s0 = inlined_call_operand.vmem [shape: f32[2,512,16], index: 0, kind: input, shape index: {}]
  %s1 = inlined_call_operand.vmem [shape: f32[2,16,512], index: 1, kind: input, shape index: {}]
  %s2 = inlined_call_operand.vmem [shape: f32[17,16], index: 2, kind: input, shape index: {}]
  %s3 = inlined_call_operand.vmem [shape: f32[17,16], index: 3, kind: input, shape index: {}]
  %s4 = inlined_call_operand.vmem [shape: f32[17,1], index: 4, kind: input, shape index: {}]
  %s5 = inlined_call_operand.hbm [shape: f32[2,16,512], index: 5, kind: output, shape index: {}]
  %s6 = sld [smem:[#allocation0]]
  $region91: #{tpu_custom_call.1} parent=0
    _
  %s8 = ssub.s32 1, %s6
  %s9 = scalar_select 0, %s8, %s6
  $region1: #{tpu_custom_call.1} parent=0
    #allocation2 [shape = 'u8[16384]{0}', space=vmem, size = 0x4000, scoped, tag = 'input window, operand 1']
    #allocation3 [shape = 'u8[16384]{0}', space=vmem, size = 0x4000, scoped, tag = 'output window, operand 0']
    #allocation4 [shape = 's32[2]{0}', space=sflag, size = 0x8, scoped, tag = 'scoped memory for tpu_custom_call.1']
    %10 = vsyncpa [#allocation4], 0
    %s11 = scalar_lea.sflag [#allocation4], 1
    %12 = vsyncpa %s11, 0
    loop: start=0, step=1, limit=10
    $region2: #{tpu_custom_call.1} parent=1 // loop_pre_header
      _
    $region3: #{tpu_custom_call.1} parent=1 // loop_header
      %s14 = sphi 0, %s18
      %p15 = scmp.ge.s32.totalorder %s14, 10
      %s21 = sphi 0, %s33
      %s22 = sphi 0, %s29
      %s23 = sphi 0, %s21
      %s24 = sphi 0, %s22
      %s25 = sphi 0, %s23
      %s26 = sphi 0, %s24
      %s38 = sphi 0, %s40
      %s41 = sphi 0, %s38
      %s42 = sphi 0, %s41
      %s58 = sphi 0, %s42
      %s66 = sphi 0, %s68
      %s69 = sphi 0, %s66
      %s70 = sphi 0, %s69
      %s86 = sphi 0, %s70
      %s90 = sphi 0, %s90
      %s92 = sphi 0, %s90
      %s93 = sphi 0, %s92
      %s107 = sphi 0, %s93
      %s111 = sphi 0, %s111
      %s113 = sphi 0, %s111
      %s114 = sphi 0, %s113
      %s128 = sphi 0, %s114
      %s132 = sphi 0, %s132
      %s134 = sphi 0, %s132
      %s135 = sphi 0, %s134
      %s149 = sphi 0, %s135
      %s157 = sphi 0, %s159
      %s160 = sphi 0, %s157
      %s161 = sphi 0, %s160
      %s177 = sphi 0, %s161
    $region4: #{tpu_custom_call.1} parent=1 // loop_header_branch
      %17 = sbr.rel (%p15) target = $region8
    $region5: #{tpu_custom_call.1} parent=1 // loop_body
      %s19 = ssub.s32 %s14, 1
      %s20 = ssub.s32 %s14, 2
      %s27 = sadd.s32 1, %s22
      %p28 = scmp.ge.s32.totalorder %s27, 4
      %s29 = scalar_select %p28, 0, %s27
      %s30 = sadd.s32 1, %s21
      %s31 = scalar_select %p28, %s30, %s21
      %p32 = scmp.ge.s32.totalorder %s31, 2
      %s33 = scalar_select %p32, 0, %s31
      %s34 = ssub.s32 %s21, %s33
      %s35 = ssub.s32 %s22, %s29
      %s36 = sor.u32 %s34, %s35
      %p37 = scmp.eq.s32.totalorder %s36, 0
      %s39 = sadd.s32 %s38, 1
      %s40 = scalar_select %p37, %s38, %s39
      %p43 = pneg %p37
      %p44 = scmp.eq.s32.totalorder %s14, 7
      %p45 = por %p43, %p44
      %p46 = scmp.ne.s32.totalorder %s38, %s41
      %p47 = scmp.eq.s32.totalorder %s14, 0
      %p48 = por %p46, %p47
      %p49 = scmp.ne.s32.totalorder %s38, %s41
      %p50 = scmp.eq.s32.totalorder %s19, 7
      %p51 = por %p49, %p50
      %p52 = scmp.ne.s32.totalorder %s41, %s42
      %p53 = scmp.eq.s32.totalorder %s19, 0
      %p54 = por %p52, %p53
      %p55 = scmp.ne.s32.totalorder %s41, %s42
      %p56 = scmp.eq.s32.totalorder %s20, 7
      %p57 = por %p55, %p56
      %p59 = scmp.ne.s32.totalorder %s42, %s58
      %p60 = scmp.eq.s32.totalorder %s20, 0
      %p61 = por %p59, %p60
      %s62 = ssub.s32 %s21, %s33
      %s63 = ssub.s32 %s22, %s29
      %s64 = sor.u32 %s62, %s63
      %p65 = scmp.eq.s32.totalorder %s64, 0
      %s67 = sadd.s32 %s66, 1
      %s68 = scalar_select %p65, %s66, %s67
      %p71 = pneg %p65
      %p72 = scmp.eq.s32.totalorder %s14, 7
      %p73 = por %p71, %p72
      %p74 = scmp.ne.s32.totalorder %s66, %s69
      %p75 = scmp.eq.s32.totalorder %s14, 0
      %p76 = por %p74, %p75
      %p77 = scmp.ne.s32.totalorder %s66, %s69
      %p78 = scmp.eq.s32.totalorder %s19, 7
      %p79 = por %p77, %p78
      %p80 = scmp.ne.s32.totalorder %s69, %s70
      %p81 = scmp.eq.s32.totalorder %s19, 0
      %p82 = por %p80, %p81
      %p83 = scmp.ne.s32.totalorder %s69, %s70
      %p84 = scmp.eq.s32.totalorder %s20, 7
      %p85 = por %p83, %p84
      %p87 = scmp.ne.s32.totalorder %s70, %s86
      %p88 = scmp.eq.s32.totalorder %s20, 0
      %p89 = por %p87, %p88
      %s91 = sadd.s32 %s90, 1
      %p94 = scmp.eq.s32.totalorder %s14, 7
      %p95 = scmp.ne.s32.totalorder %s90, %s92
      %p96 = scmp.eq.s32.totalorder %s14, 0
      %p97 = por %p95, %p96
      %p98 = scmp.ne.s32.totalorder %s90, %s92
      %p99 = scmp.eq.s32.totalorder %s19, 7
      %p100 = por %p98, %p99
      %p101 = scmp.ne.s32.totalorder %s92, %s93
      %p102 = scmp.eq.s32.totalorder %s19, 0
      %p103 = por %p101, %p102
      %p104 = scmp.ne.s32.totalorder %s92, %s93
      %p105 = scmp.eq.s32.totalorder %s20, 7
      %p106 = por %p104, %p105
      %p108 = scmp.ne.s32.totalorder %s93, %s107
      %p109 = scmp.eq.s32.totalorder %s20, 0
      %p110 = por %p108, %p109
      %s112 = sadd.s32 %s111, 1
      %p115 = scmp.eq.s32.totalorder %s14, 7
      %p116 = scmp.ne.s32.totalorder %s111, %s113
      %p117 = scmp.eq.s32.totalorder %s14, 0
      %p118 = por %p116, %p117
      %p119 = scmp.ne.s32.totalorder %s111, %s113
      %p120 = scmp.eq.s32.totalorder %s19, 7
      %p121 = por %p119, %p120
      %p122 = scmp.ne.s32.totalorder %s113, %s114
      %p123 = scmp.eq.s32.totalorder %s19, 0
      %p124 = por %p122, %p123
      %p125 = scmp.ne.s32.totalorder %s113, %s114
      %p126 = scmp.eq.s32.totalorder %s20, 7
      %p127 = por %p125, %p126
      %p129 = scmp.ne.s32.totalorder %s114, %s128
      %p130 = scmp.eq.s32.totalorder %s20, 0
      %p131 = por %p129, %p130
      %s133 = sadd.s32 %s132, 1
      %p136 = scmp.eq.s32.totalorder %s14, 7
      %p137 = scmp.ne.s32.totalorder %s132, %s134
      %p138 = scmp.eq.s32.totalorder %s14, 0
      %p139 = por %p137, %p138
      %p140 = scmp.ne.s32.totalorder %s132, %s134
      %p141 = scmp.eq.s32.totalorder %s19, 7
      %p142 = por %p140, %p141
      %p143 = scmp.ne.s32.totalorder %s134, %s135
      %p144 = scmp.eq.s32.totalorder %s19, 0
      %p145 = por %p143, %p144
      %p146 = scmp.ne.s32.totalorder %s134, %s135
      %p147 = scmp.eq.s32.totalorder %s20, 7
      %p148 = por %p146, %p147
      %p150 = scmp.ne.s32.totalorder %s135, %s149
      %p151 = scmp.eq.s32.totalorder %s20, 0
      %p152 = por %p150, %p151
      %s153 = ssub.s32 %s21, %s33
      %s154 = ssub.s32 %s22, %s29
      %s155 = sor.u32 %s153, %s154
      %p156 = scmp.eq.s32.totalorder %s155, 0
      %s158 = sadd.s32 %s157, 1
      %s159 = scalar_select %p156, %s157, %s158
      %p162 = pneg %p156
      %p163 = scmp.eq.s32.totalorder %s14, 7
      %p164 = por %p162, %p163
      %p165 = scmp.ne.s32.totalorder %s157, %s160
      %p166 = scmp.eq.s32.totalorder %s14, 0
      %p167 = por %p165, %p166
      %p168 = scmp.ne.s32.totalorder %s157, %s160
      %p169 = scmp.eq.s32.totalorder %s19, 7
      %p170 = por %p168, %p169
      %p171 = scmp.ne.s32.totalorder %s160, %s161
      %p172 = scmp.eq.s32.totalorder %s19, 0
      %p173 = por %p171, %p172
      %p174 = scmp.ne.s32.totalorder %s160, %s161
      %p175 = scmp.eq.s32.totalorder %s20, 7
      %p176 = por %p174, %p175
      %p178 = scmp.ne.s32.totalorder %s161, %s177
      %p179 = scmp.eq.s32.totalorder %s20, 0
      %p180 = por %p178, %p179
      %p181 = scmp.le.s32.totalorder 1, %s14
      %p182 = scmp.lt.s32.totalorder %s14, 9
      %p183 = pnand %p181, %p182
      %p184 = pneg %p183
      // Predicated region
      $region9: #{tpu_custom_call.1} parent=5 // pred_check
        _
      $region10: #{tpu_custom_call.1} parent=5 // pred_check_branch
        %186 = sbr.rel (%p183) target = $region12
      $region11: #{tpu_custom_call.1} parent=5 // pred_region
        %s187 = ssub.s32 %s14, 1
        // Predicated region
        $region13: #{tpu_custom_call.1} parent=11 // pred_check
          %p188 = pneg %p103
        $region14: #{tpu_custom_call.1} parent=11 // pred_check_branch
          %190 = sbr.rel (%p188) target = $region16
        $region15: #{tpu_custom_call.1} parent=11 // pred_region
          _
        $region16: #{tpu_custom_call.1} parent=11 // pred_fallthru
          _
        // Predicated region
        $region17: #{tpu_custom_call.1} parent=11 // pred_check
          %p191 = pneg %p124
        $region18: #{tpu_custom_call.1} parent=11 // pred_check_branch
          %193 = sbr.rel (%p191) target = $region20
        $region19: #{tpu_custom_call.1} parent=11 // pred_region
          _
        $region20: #{tpu_custom_call.1} parent=11 // pred_fallthru
          _
        // Predicated region
        $region21: #{tpu_custom_call.1} parent=11 // pred_check
          %p194 = pneg %p145
        $region22: #{tpu_custom_call.1} parent=11 // pred_check_branch
          %196 = sbr.rel (%p194) target = $region24
        $region23: #{tpu_custom_call.1} parent=11 // pred_region
          _
        $region24: #{tpu_custom_call.1} parent=11 // pred_fallthru
          _
      $region12: #{tpu_custom_call.1} parent=5 // pred_fallthru
        _
      %p197 = scmp.lt.s32.totalorder %s14, 8
      // Predicated region
      $region25: #{tpu_custom_call.1} parent=5 // pred_check
        %p198 = pneg %p197
      $region26: #{tpu_custom_call.1} parent=5 // pred_check_branch
        %200 = sbr.rel (%p198) target = $region28
      $region27: #{tpu_custom_call.1} parent=5 // pred_region
        // Predicated region
        $region29: #{tpu_custom_call.1} parent=27 // pred_check
          %p201 = pneg %p48
        $region30: #{tpu_custom_call.1} parent=27 // pred_check_branch
          %203 = sbr.rel (%p201) target = $region32
        $region31: #{tpu_custom_call.1} parent=27 // pred_region
          %s204 = smul.u32 16, %s22
          %p205 = scmp.lt.s32.totalorder %s21, 1
          %s206 = scalar_select %p205, %s21, 1
          %p207 = scmp.lt.s32.totalorder %s204, 63
          %s208 = scalar_select %p207, %s204, 63
          %s209 = smul.addr %s206, 64
          %s210 = sadd.s32 %s208, %s209
          %s211 = smul.addr %s210, 8
          %s212 = scalar_lea.vmem %s0, %s211
          %s213 = smul.u32 16, %s22
        $region32: #{tpu_custom_call.1} parent=27 // pred_fallthru
          _
        // Predicated region
        $region33: #{tpu_custom_call.1} parent=27 // pred_check
          %p214 = pneg %p76
        $region34: #{tpu_custom_call.1} parent=27 // pred_check_branch
          %216 = sbr.rel (%p214) target = $region36
        $region35: #{tpu_custom_call.1} parent=27 // pred_region
          %s217 = sand.u32 %s66, 1
          %s218 = sand.u32 %s66, 1
          %s219 = smul.addr %s218, 16
          %s220 = scalar_lea.vmem [#allocation2], %s219
          %s221 = smul.addr %s21, 8
          %s222 = sadd.s32 %s22, %s221
          %s223 = smul.addr %s222, 8
          %s224 = scalar_lea.vmem %s1, %s223
          // Predicated region
          $region37: #{tpu_custom_call.1} parent=35 // pred_check
            _
          $region38: #{tpu_custom_call.1} parent=35 // pred_check_branch
            %226 = sbr.rel (0) target = $region40
          $region39: #{tpu_custom_call.1} parent=35 // pred_region
            // Predicated region
            $region41: #{tpu_custom_call.1} parent=39 // pred_check
              _
            $region42: #{tpu_custom_call.1} parent=39 // pred_check_branch
              %228 = sbr.rel (0) target = $region44
            $region43: #{tpu_custom_call.1} parent=39 // pred_region
              // Predicated region
              $region56: #{tpu_custom_call.1} parent=43 // pred_check
                _
              $region57: #{tpu_custom_call.1} parent=43 // pred_check_branch
                %245 = sbr.rel (0) target = $region59
              $region58: #{tpu_custom_call.1} parent=43 // pred_region
                loop: start=0, step=1, limit=1
                $region60: #{tpu_custom_call.1} parent=58 // loop_pre_header
                  _
                $region61: #{tpu_custom_call.1} parent=58 // loop_header
                  %s247 = sphi 0, %s251
                  %p248 = scmp.ge.s32.totalorder %s247, 1
                  %s252 = sphi %s224, %s224
                  %s253 = sphi %s220, %s220
                $region62: #{tpu_custom_call.1} parent=58 // loop_header_branch
                  %250 = sbr.rel (%p248) target = $region66
                $region63: #{tpu_custom_call.1} parent=58 // loop_body
                  %v254 = vld [vmem:[%s252] sm:$0xff]
                  %255 = vst [vmem:[%s253] sm:$0xff] %v254
                  %v256 = vld [vmem:[%s252 + $0x20] sm:$0xff]
                  %257 = vst [vmem:[%s253 + $0x8] sm:$0xff] %v256
                $region64: #{tpu_custom_call.1} parent=58 // loop_footer
                  %s251 = sadd.s32 1, %s247
                $region65: #{tpu_custom_call.1} parent=58 // loop_footer_branch
                  %246 = sbr.rel target = $region61
                $region66: #{tpu_custom_call.1} parent=58 // loop_exit
                  _
              $region59: #{tpu_custom_call.1} parent=43 // pred_fallthru
                _
              // Predicated region
              $region67: #{tpu_custom_call.1} parent=43 // pred_check
                _
              $region68: #{tpu_custom_call.1} parent=43 // pred_check_branch
                %259 = sbr.rel target = $region70
              $region69: #{tpu_custom_call.1} parent=43 // pred_region
                _
              $region70: #{tpu_custom_call.1} parent=43 // pred_fallthru
                _
            $region44: #{tpu_custom_call.1} parent=39 // pred_fallthru
              _
            // Predicated region
            $region45: #{tpu_custom_call.1} parent=39 // pred_check
              _
            $region46: #{tpu_custom_call.1} parent=39 // pred_check_branch
              %230 = sbr.rel target = $region48
            $region47: #{tpu_custom_call.1} parent=39 // pred_region
              loop: start=0, step=1, limit=1
              $region49: #{tpu_custom_call.1} parent=47 // loop_pre_header
                _
              $region50: #{tpu_custom_call.1} parent=47 // loop_header
                %s233 = sphi 0, %s237
                %p234 = scmp.ge.s32.totalorder %s233, 1
                %s238 = sphi %s224, %s224
                %s239 = sphi %s220, %s220
              $region51: #{tpu_custom_call.1} parent=47 // loop_header_branch
                %236 = sbr.rel (%p234) target = $region55
              $region52: #{tpu_custom_call.1} parent=47 // loop_body
                %v240 = vld [vmem:[%s238] sm:$0xff]
                %241 = vst [vmem:[%s239] sm:$0xff] %v240
                %v242 = vld [vmem:[%s238 + $0x20] sm:$0xff]
                %243 = vst [vmem:[%s239 + $0x8] sm:$0xff] %v242
              $region53: #{tpu_custom_call.1} parent=47 // loop_footer
                %s237 = sadd.s32 1, %s233
              $region54: #{tpu_custom_call.1} parent=47 // loop_footer_branch
                %232 = sbr.rel target = $region50
              $region55: #{tpu_custom_call.1} parent=47 // loop_exit
                _
            $region48: #{tpu_custom_call.1} parent=39 // pred_fallthru
              _
          $region40: #{tpu_custom_call.1} parent=35 // pred_fallthru
            _
          %260 = vnop
        $region36: #{tpu_custom_call.1} parent=27 // pred_fallthru
          _
      $region28: #{tpu_custom_call.1} parent=5 // pred_fallthru
        _
      %p261 = scmp.le.s32.totalorder 1, %s14
      %p262 = scmp.lt.s32.totalorder %s14, 9
      %p263 = pnand %p261, %p262
      %p264 = pneg %p263
      // Predicated region
      $region71: #{tpu_custom_call.1} parent=5 // pred_check
        _
      $region72: #{tpu_custom_call.1} parent=5 // pred_check_branch
        %266 = sbr.rel (%p263) target = $region74
      $region73: #{tpu_custom_call.1} parent=5 // pred_region
        %s267 = ssub.s32 %s14, 1
        %s268 = sand.u32 %s69, 1
        %s269 = sand.u32 %s69, 1
        %s270 = smul.addr %s269, 16
        %s271 = scalar_lea.vmem [#allocation2], %s270
        // Predicated region
        $region75: #{tpu_custom_call.1} parent=73 // pred_check
          %p272 = pneg %p82
        $region76: #{tpu_custom_call.1} parent=73 // pred_check_branch
          %274 = sbr.rel (%p272) target = $region78
        $region77: #{tpu_custom_call.1} parent=73 // pred_region
          _
        $region78: #{tpu_custom_call.1} parent=73 // pred_fallthru
          _
        %s275 = smul.u32 16, %s24
        %p276 = scmp.lt.s32.totalorder %s23, 1
        %s277 = scalar_select %p276, %s23, 1
        %p278 = scmp.lt.s32.totalorder %s275, 63
        %s279 = scalar_select %p278, %s275, 63
        %s280 = smul.addr %s277, 64
        %s281 = sadd.s32 %s279, %s280
        %s282 = smul.addr %s281, 8
        %s283 = scalar_lea.vmem %s0, %s282
        %p284 = pneg %p54
        %p285 = pneg %p51
        %s286 = sand.u32 %s69, 1
        %s287 = sand.u32 %s69, 1
        %s288 = smul.addr %s287, 16
        %s289 = scalar_lea.vmem [#allocation2], %s288
        %p290 = pneg %p82
        %p291 = pneg %p79
        %p292 = pneg %p103
        %p293 = pneg %p100
        %p294 = pneg %p124
        %p295 = pneg %p121
        %p296 = pneg %p145
        %p297 = pneg %p142
        %p298 = pneg %p173
        %p299 = pneg %p170
        %s300 = sand.u32 %s160, 1
        %s301 = scalar_lea.sflag [#allocation4], %s300
        %s302 = sand.u32 %s160, 1
        %s303 = smul.addr %s302, 16
        %s304 = scalar_lea.vmem [#allocation3], %s303
        %s305 = smul.u32 16, %s24
        %p306 = scmp.lt.s32.totalorder %s23, 1
        %s307 = scalar_select %p306, %s23, 1
        %p308 = scmp.lt.s32.totalorder %s305, 63
        %s309 = scalar_select %p308, %s305, 63
        %s310 = smul.addr %s307, 64
        %s311 = sadd.s32 %s309, %s310
        %s312 = smul.addr %s311, 8
        %s313 = scalar_lea.vmem %s0, %s312
        %s314 = smul.u32 16, %s24
        %v315 = vld [vmem:[%s313] sm:$0xff]
        %v316 = vld [vmem:[%s313 + $0x8] sm:$0xff]
        %v317 = vld [vmem:[%s313 + $0x10] sm:$0xff]
        %v318 = vld [vmem:[%s313 + $0x18] sm:$0xff]
        %v319 = vld [vmem:[%s313 + $0x20] sm:$0xff]
        %v320 = vld [vmem:[%s313 + $0x28] sm:$0xff]
        %v321 = vld [vmem:[%s313 + $0x30] sm:$0xff]
        %v322 = vld [vmem:[%s313 + $0x38] sm:$0xff]
        %v323 = vld [vmem:[%s313 + $0x40] sm:$0xff]
        %v324 = vld [vmem:[%s313 + $0x48] sm:$0xff]
        %v325 = vld [vmem:[%s313 + $0x50] sm:$0xff]
        %v326 = vld [vmem:[%s313 + $0x58] sm:$0xff]
        %v327 = vld [vmem:[%s313 + $0x60] sm:$0xff]
        %v328 = vld [vmem:[%s313 + $0x68] sm:$0xff]
        %v329 = vld [vmem:[%s313 + $0x70] sm:$0xff]
        %v330 = vld [vmem:[%s313 + $0x78] sm:$0xff]
        %v331 = vld [vmem:[%s271] sm:$0xff]
        %v332 = vld [vmem:[%s271 + $0x8] sm:$0xff]
        %v333 = vld [vmem:[%s2] sm:$0xff]
        %v334 = vld [vmem:[%s2 + $0x8] sm:$0xff]
        %v335 = vld [vmem:[%s2 + $0x10] sm:$0x1]
        %v336 = vld [vmem:[%s3] sm:$0xff]
        %v337 = vld [vmem:[%s3 + $0x8] sm:$0xff]
        %v338 = vld [vmem:[%s3 + $0x10] sm:$0x1]
        %v339 = vld [vmem:[%s4] sm:$0xff]
        %v340 = vld [vmem:[%s4 + $0x8] sm:$0xff]
        %v341 = vld [vmem:[%s4 + $0x10] sm:$0x1]
        %vm342 = vcmask 130048
        %v344 = vsel %vm342, %v333, 0
        %v347 = vsel %vm342, %v334, 0
        %v350 = vsel %vm342, %v335, 0
        %v353 = vsel %vm342, %v315, 0
        %v356 = vsel %vm342, %v316, 0
        %v359 = vsel %vm342, %v317, 0
        %v362 = vsel %vm342, %v318, 0
        %v365 = vsel %vm342, %v319, 0
        %v368 = vsel %vm342, %v320, 0
        %v371 = vsel %vm342, %v321, 0
        %v374 = vsel %vm342, %v322, 0
        %v377 = vsel %vm342, %v323, 0
        %v380 = vsel %vm342, %v324, 0
        %v383 = vsel %vm342, %v325, 0
        %v386 = vsel %vm342, %v326, 0
        %v389 = vsel %vm342, %v327, 0
        %v392 = vsel %vm342, %v328, 0
        %v395 = vsel %vm342, %v329, 0
        %v398 = vsel %vm342, %v330, 0
        %400 = vmatprep.subr.mxu0 0.0
        %401 = vmatpush1.xpose.msra.mxu0 %v353
        %402 = vmatprep.subr.mxu0 0.0
        %403 = vmatpush1.xpose.msra.mxu0 %v356
        %404 = vmatprep.subr.mxu0 0.0
        %405 = vmatpush1.xpose.msra.mxu0 %v359
        %406 = vmatprep.subr.mxu0 0.0
        %407 = vmatpush1.xpose.msra.mxu0 %v362
        %408 = vmatprep.subr.mxu0 0.0
        %409 = vmatpush1.xpose.msra.mxu0 %v365
        %410 = vmatprep.subr.mxu0 0.0
        %411 = vmatpush1.xpose.msra.mxu0 %v368
        %412 = vmatprep.subr.mxu0 0.0
        %413 = vmatpush1.xpose.msra.mxu0 %v371
        %414 = vmatprep.subr.mxu0 0.0
        %415 = vmatpush1.xpose.msra.mxu0 %v374
        %416 = vmatprep.subr.mxu0 0.0
        %417 = vmatpush1.xpose.msra.mxu0 %v377
        %418 = vmatprep.subr.mxu0 0.0
        %419 = vmatpush1.xpose.msra.mxu0 %v380
        %420 = vmatprep.subr.mxu0 0.0
        %421 = vmatpush1.xpose.msra.mxu0 %v383
        %422 = vmatprep.subr.mxu0 0.0
        %423 = vmatpush1.xpose.msra.mxu0 %v386
        %424 = vmatprep.subr.mxu0 0.0
        %425 = vmatpush1.xpose.msra.mxu0 %v389
        %426 = vmatprep.subr.mxu0 0.0
        %427 = vmatpush1.xpose.msra.mxu0 %v392
        %428 = vmatprep.subr.mxu0 0.0
        %429 = vmatpush1.xpose.msra.mxu0 %v395
        %430 = vmatprep.subr.mxu0 0.0
        %431 = vmatpush1.xpose.msra.mxu0 %v398
        %432 = vmatprep.subr.mxu0 0.0
        %433 = vmatpush1.xpose.msra.mxu0 0.0
        %434 = vmatprep.subr.mxu0 0.0
        %435 = vmatpush1.xpose.msra.mxu0 0.0
        %436 = vmatprep.subr.mxu0 0.0
        %437 = vmatpush1.xpose.msra.mxu0 0.0
        %438 = vmatprep.subr.mxu0 0.0
        %439 = vmatpush1.xpose.msra.mxu0 0.0
        %440 = vmatprep.subr.mxu0 0.0
        %441 = vmatpush1.xpose.msra.mxu0 0.0
        %442 = vmatprep.subr.mxu0 0.0
        %443 = vmatpush1.xpose.msra.mxu0 0.0
        %444 = vmatprep.subr.mxu0 0.0
        %445 = vmatpush1.xpose.msra.mxu0 0.0
        %446 = vmatprep.subr.mxu0 0.0
        %447 = vmatpush1.xpose.msra.mxu0 0.0
        %448 = vmatprep.subr.mxu0 0.0
        %449 = vmatpush1.xpose.msra.mxu0 0.0
        %450 = vmatprep.subr.mxu0 0.0
        %451 = vmatpush1.xpose.msra.mxu0 0.0
        %452 = vmatprep.subr.mxu0 0.0
        %453 = vmatpush1.xpose.msra.mxu0 0.0
        %454 = vmatprep.subr.mxu0 0.0
        %455 = vmatpush1.xpose.msra.mxu0 0.0
        %456 = vmatprep.subr.mxu0 0.0
        %457 = vmatpush1.xpose.msra.mxu0 0.0
        %458 = vmatprep.subr.mxu0 0.0
        %459 = vmatpush1.xpose.msra.mxu0 0.0
        %460 = vmatprep.subr.mxu0 0.0
        %461 = vmatpush1.xpose.msra.mxu0 0.0
        %462 = vmatprep.subr.mxu0 0.0
        %463 = vmatpush1.xpose.msra.mxu0 0.0
        %464 = vmatprep.mubr.f32.mxu0 0.0
        %465 = vmatmul.mubr.f32.gmra.mrb[0].mxu0 %v344
        %v466 = vpop.f32.mrb[0].mxu0
        %v467 = vadd.f32 0.0, %v466
        %v468 = vpop.f32.mrb[0].mxu0
        %469 = vmatprep.mubr.f32.mxu0 0.0
        %470 = vmatmul.mubr.f32.gmra.mrb[0].mxu0 %v347
        %v471 = vpop.f32.mrb[0].mxu0
        %v472 = vadd.f32 0.0, %v471
        %v473 = vpop.f32.mrb[0].mxu0
        %474 = vmatprep.mubr.f32.mxu0 0.0
        %475 = vmatmul.mubr.f32.gmra.mrb[0].mxu0 %v350
        %v476 = vpop.f32.mrb[0].mxu0
        %v477 = vadd.f32 0.0, %v476
        %v478 = vpop.f32.mrb[0].mxu0
        %479 = vdwg.mxu0
        %v481 = vsel %vm342, %v336, 0
        %v484 = vsel %vm342, %v337, 0
        %v487 = vsel %vm342, %v338, 0
        %489 = vmatprep.subr.mxu0 0.0
        %490 = vmatpush1.msra.mxu0 %v331
        %491 = vmatprep.subr.mxu0 0.0
        %492 = vmatpush1.msra.mxu0 %v332
        %493 = vmatprep.subr.mxu0 0.0
        %494 = vmatpush1.msra.mxu0 0.0
        %495 = vmatprep.subr.mxu0 0.0
        %496 = vmatpush1.msra.mxu0 0.0
        %497 = vmatprep.subr.mxu0 0.0
        %498 = vmatpush1.msra.mxu0 0.0
        %499 = vmatprep.subr.mxu0 0.0
        %500 = vmatpush1.msra.mxu0 0.0
        %501 = vmatprep.subr.mxu0 0.0
        %502 = vmatpush1.msra.mxu0 0.0
        %503 = vmatprep.subr.mxu0 0.0
        %504 = vmatpush1.msra.mxu0 0.0
        %505 = vmatprep.subr.mxu0 0.0
        %506 = vmatpush1.msra.mxu0 0.0
        %507 = vmatprep.subr.mxu0 0.0
        %508 = vmatpush1.msra.mxu0 0.0
        %509 = vmatprep.subr.mxu0 0.0
        %510 = vmatpush1.msra.mxu0 0.0
        %511 = vmatprep.subr.mxu0 0.0
        %512 = vmatpush1.msra.mxu0 0.0
        %513 = vmatprep.subr.mxu0 0.0
        %514 = vmatpush1.msra.mxu0 0.0
        %515 = vmatprep.subr.mxu0 0.0
        %516 = vmatpush1.msra.mxu0 0.0
        %517 = vmatprep.subr.mxu0 0.0
        %518 = vmatpush1.msra.mxu0 0.0
        %519 = vmatprep.subr.mxu0 0.0
        %520 = vmatpush1.msra.mxu0 0.0
        %521 = vmatprep.subr.mxu0 0.0
        %522 = vmatpush1.msra.mxu0 0.0
        %523 = vmatprep.subr.mxu0 0.0
        %524 = vmatpush1.msra.mxu0 0.0
        %525 = vmatprep.subr.mxu0 0.0
        %526 = vmatpush1.msra.mxu0 0.0
        %527 = vmatprep.subr.mxu0 0.0
        %528 = vmatpush1.msra.mxu0 0.0
        %529 = vmatprep.subr.mxu0 0.0
        %530 = vmatpush1.msra.mxu0 0.0
        %531 = vmatprep.subr.mxu0 0.0
        %532 = vmatpush1.msra.mxu0 0.0
        %533 = vmatprep.subr.mxu0 0.0
        %534 = vmatpush1.msra.mxu0 0.0
        %535 = vmatprep.subr.mxu0 0.0
        %536 = vmatpush1.msra.mxu0 0.0
        %537 = vmatprep.subr.mxu0 0.0
        %538 = vmatpush1.msra.mxu0 0.0
        %539 = vmatprep.subr.mxu0 0.0
        %540 = vmatpush1.msra.mxu0 0.0
        %541 = vmatprep.subr.mxu0 0.0
        %542 = vmatpush1.msra.mxu0 0.0
        %543 = vmatprep.subr.mxu0 0.0
        %544 = vmatpush1.msra.mxu0 0.0
        %545 = vmatprep.subr.mxu0 0.0
        %546 = vmatpush1.msra.mxu0 0.0
        %547 = vmatprep.subr.mxu0 0.0
        %548 = vmatpush1.msra.mxu0 0.0
        %549 = vmatprep.subr.mxu0 0.0
        %550 = vmatpush1.msra.mxu0 0.0
        %551 = vmatprep.subr.mxu0 0.0
        %552 = vmatpush1.msra.mxu0 0.0
        %553 = vmatprep.mubr.f32.mxu0 0.0
        %554 = vmatmul.mubr.f32.gmra.mrb[0].mxu0 %v481
        %v555 = vpop.f32.mrb[0].mxu0
        %v556 = vadd.f32 0.0, %v555
        %v557 = vpop.f32.mrb[0].mxu0
        %558 = vmatprep.mubr.f32.mxu0 0.0
        %559 = vmatmul.mubr.f32.gmra.mrb[0].mxu0 %v484
        %v560 = vpop.f32.mrb[0].mxu0
        %v561 = vadd.f32 0.0, %v560
        %v562 = vpop.f32.mrb[0].mxu0
        %563 = vmatprep.mubr.f32.mxu0 0.0
        %564 = vmatmul.mubr.f32.gmra.mrb[0].mxu0 %v487
        %v565 = vpop.f32.mrb[0].mxu0
        %v566 = vadd.f32 0.0, %v565
        %v567 = vpop.f32.mrb[0].mxu0
        %568 = vdwg.mxu0
        %v569 = vadd.f32 %v477, %v566
        %571 = vset.pattern.permute.xlu0 0
        %572 = vperm.xlu0 %571, %v341
        %v573 = vpop.permute.xlu0 %572
        %v575 = vadd.f32 %v569, %v573
        %v576 = vmax.f32 %v575, 0.0
        %v577 = vxor.u32 %v576, 2147483648
        %v578 = vmul.f32 %v577, 1.442695
        %v579 = vpow.pop %v578
        %v580 = vadd.f32 %v579, 1.0
        %v581 = vrcp.pop %v580
        %v582 = vmul.f32 1.0, %v581
        %v583 = vlaneseq
        %v584 = vshrl.u32 %v583, 7
        %v585 = vsub.s32 0, %v584
        %v586 = vrot.slane %v582, %v585
        %v587 = vmul.f32 %v556, %v586
        %v588 = vmul.f32 %v561, %v586
        %v589 = vadd.f32 %v467, %v587
        %v590 = vadd.f32 %v472, %v588
        %592 = vset.pattern.permute.xlu0 0
        %593 = vperm.xlu0 %592, %v339
        %v594 = vpop.permute.xlu0 %593
        %597 = vset.pattern.permute.xlu0 0
        %598 = vperm.xlu0 %597, %v340
        %v599 = vpop.permute.xlu0 %598
        %v601 = vadd.f32 %v589, %v594
        %v602 = vadd.f32 %v590, %v599
        %v603 = vmax.f32 %v601, 0.0
        %v604 = vmax.f32 %v602, 0.0
        %605 = vst [vmem:[%s304] sm:$0xff] %v603
        %606 = vst [vmem:[%s304 + $0x8] sm:$0xff] %v604
        %s607 = sand.u32 %s160, 1
        %s608 = scalar_lea.sflag [#allocation4], %s607
        %s609 = sand.u32 %s160, 1
        %s610 = smul.addr %s609, 16
        %s611 = scalar_lea.vmem [#allocation3], %s610
        // Predicated region
        $region79: #{tpu_custom_call.1} parent=73 // pred_check
          %p612 = pneg %p170
        $region80: #{tpu_custom_call.1} parent=73 // pred_check_branch
          %614 = sbr.rel (%p612) target = $region82
        $region81: #{tpu_custom_call.1} parent=73 // pred_region
          %s616 = ssub.s32 256, 256
          %617 = vsyncadd %s608, %s616
          %s618 = smul.addr %s23, 8
          %s619 = sadd.s32 %s24, %s618
          %s620 = smul.addr %s619, 128
          %s621 = scalar_lea.hbm %s5, %s620
          %s622 = sshll.u32 %s611, 4
          %s623 = int_to_ptr.vmem [resolvable:$true] %s622
          %628 = dma.vmem_to_hbm [thread:$0]  %s623, 256, %s621, %s608, 128, 512, 8
        $region82: #{tpu_custom_call.1} parent=73 // pred_fallthru
          _
      $region74: #{tpu_custom_call.1} parent=5 // pred_fallthru
        _
      %p629 = scmp.le.s32.totalorder 2, %s14
      // Predicated region
      $region83: #{tpu_custom_call.1} parent=5 // pred_check
        %p630 = pneg %p629
      $region84: #{tpu_custom_call.1} parent=5 // pred_check_branch
        %632 = sbr.rel (%p630) target = $region86
      $region85: #{tpu_custom_call.1} parent=5 // pred_region
        %s633 = ssub.s32 %s14, 2
        // Predicated region
        $region87: #{tpu_custom_call.1} parent=85 // pred_check
          %p634 = pneg %p176
        $region88: #{tpu_custom_call.1} parent=85 // pred_check_branch
          %636 = sbr.rel (%p634) target = $region90
        $region89: #{tpu_custom_call.1} parent=85 // pred_region
          %s637 = sand.u32 %s161, 1
          %s638 = scalar_lea.sflag [#allocation4], %s637
          %s639 = sand.u32 %s161, 1
          %s640 = smul.addr %s639, 16
          %s641 = scalar_lea.vmem [#allocation3], %s640
          %642 = dma.done %s638, 256
        $region90: #{tpu_custom_call.1} parent=85 // pred_fallthru
          _
      $region86: #{tpu_custom_call.1} parent=5 // pred_fallthru
        _
    $region6: #{tpu_custom_call.1} parent=1 // loop_footer
      %s18 = sadd.s32 1, %s14
    $region7: #{tpu_custom_call.1} parent=1 // loop_footer_branch
      %13 = sbr.rel target = $region3
    $region8: #{tpu_custom_call.1} parent=1 // loop_exit
      _
    %643 = vsyncpa [#allocation4], 1
    %s644 = scalar_lea.sflag [#allocation4], 1
    %645 = vsyncpa %s644, 1

</llo_original>
